<compile_context>
chip_gen: v5e
topology: v5e:2x2
jax: 0.10.0
libtpu: 0.0.40
codegen_flags: <defaults>
</compile_context>

<pallas_src>
import functools

import jax
import jax.numpy as jnp
from jax.experimental import pallas as pl
from jax.experimental.pallas import tpu as pltpu


_ACTIVATIONS = {
    "relu": lambda y: jnp.maximum(y, 0.0),
    "tanh": jnp.tanh,
    "sigmoid": jax.nn.sigmoid,
    "identity": lambda y: y,
}


def _round_up(v, m):
    return ((v + m - 1) // m) * m


def conv_bn_act_kernel(x_ref, w_ref, scale_ref, shift_ref, o_ref, acc_ref, *,
                       activ):
    # x_ref:     (TM, TK)  im2col rows for this (M, K) tile
    # w_ref:     (TK, TN)  conv weights reshaped (kh, kw, ci) x co
    # scale_ref: (1, TN)   folded BN scale
    # shift_ref: (1, TN)   folded BN shift (+ conv bias if any)
    # o_ref:     (TM, TN)
    # acc_ref:   (TM, TN)  f32 accumulator scratch (resident across K axis)
    k = pl.program_id(2)

    @pl.when(k == 0)
    def _():
        acc_ref[...] = jnp.zeros_like(acc_ref)

    acc_ref[...] += jnp.dot(x_ref[...], w_ref[...],
                            preferred_element_type=jnp.float32)   # MXU, f32 acc

    @pl.when(k == pl.num_programs(2) - 1)
    def _():
        y = acc_ref[...] * scale_ref[...] + shift_ref[...]         # fused BN
        o_ref[...] = _ACTIVATIONS[activ](y).astype(o_ref.dtype)    # fused activ


def conv2d_bn_activ(x, weight, conv_bias=None, bn_gamma=None, bn_beta=None,
                    bn_mean=None, bn_var=None, *, stride=1, padding=0,
                    use_bn=True, activ="relu", eps=1e-5, block_m=256,
                    block_k=1024, block_n=256):
    """x: (B, Cin, H, W) NCHW; weight: (Cout, Cin, KH, KW). Returns NCHW."""
    B, Cin, H, W = x.shape
    Cout, _, KH, KW = weight.shape
    s, p = stride, padding
    OH = (H + 2 * p - KH) // s + 1
    OW = (W + 2 * p - KW) // s + 1

    # ---- wrapper-side layout plumbing: NCHW -> NHWC, pad, im2col ----
    x_nhwc = jnp.transpose(x, (0, 2, 3, 1))
    x_pad = jnp.pad(x_nhwc, ((0, 0), (p, p), (p, p), (0, 0)))
    patches = []
    for kh in range(KH):
        for kw in range(KW):
            patches.append(
                x_pad[:, kh:kh + (OH - 1) * s + 1:s,
                      kw:kw + (OW - 1) * s + 1:s, :])            # (B,OH,OW,Cin)
    K = KH * KW * Cin
    M = B * OH * OW
    x_col = jnp.concatenate(patches, axis=-1).reshape(M, K)

    # weights (Cout, Cin, KH, KW) -> (KH, KW, Cin, Cout) -> (K, Cout)
    w_mat = jnp.transpose(weight, (2, 3, 1, 0)).reshape(K, Cout)

    # ---- fold conv bias + inference-mode BN into per-channel scale/shift ----
    if use_bn:
        scale = bn_gamma / jnp.sqrt(bn_var + eps)
        shift = bn_beta - bn_mean * scale
    else:
        scale = jnp.ones((Cout,), jnp.float32)
        shift = jnp.zeros((Cout,), jnp.float32)
    if conv_bias is not None:
        shift = shift + scale * conv_bias
    scale2 = scale.reshape(1, Cout).astype(jnp.float32)
    shift2 = shift.reshape(1, Cout).astype(jnp.float32)

    # ---- tile selection (keep tiles (8,128)-legal and VMEM-bounded) ----
    # M axis: large sublane-dense blocks.
    tm = min(block_m, _round_up(M, 8))
    tm = max(8, (tm // 8) * 8)
    Mp = _round_up(M, tm)

    # K axis (reduction): keep full K if it fits comfortably, else split into
    # lane-aligned chunks (zero-padded columns contribute nothing to the dot).
    if K <= block_k:
        tk, Kp = K, K
    else:
        tk = _round_up(block_k, 128)
        Kp = _round_up(K, tk)

    # N axis (output channels): keep full Cout when small, else 128-aligned.
    if Cout <= max(block_n, 512):
        tn, Np = Cout, Cout
    else:
        tn = _round_up(block_n, 128)
        Np = _round_up(Cout, tn)

    if (Mp, Kp) != (M, K):
        x_col = jnp.pad(x_col, ((0, Mp - M), (0, Kp - K)))
    if (Kp, Np) != (K, Cout):
        w_mat = jnp.pad(w_mat, ((0, Kp - K), (0, Np - Cout)))
    if Np != Cout:
        scale2 = jnp.pad(scale2, ((0, 0), (0, Np - Cout)))
        shift2 = jnp.pad(shift2, ((0, 0), (0, Np - Cout)))

    grid = (Mp // tm, Np // tn, Kp // tk)
    kernel = functools.partial(conv_bn_act_kernel, activ=activ)

    out_flat = pl.pallas_call(
        kernel,
        out_shape=jax.ShapeDtypeStruct((Mp, Np), x.dtype),
        grid_spec=pltpu.PrefetchScalarGridSpec(
            num_scalar_prefetch=0,
            grid=grid,
            in_specs=[
                pl.BlockSpec((tm, tk), lambda i, j, k: (i, k)),   # im2col rows
                pl.BlockSpec((tk, tn), lambda i, j, k: (k, j)),   # weights
                pl.BlockSpec((1, tn), lambda i, j, k: (0, j)),    # BN scale
                pl.BlockSpec((1, tn), lambda i, j, k: (0, j)),    # BN shift
            ],
            out_specs=pl.BlockSpec((tm, tn), lambda i, j, k: (i, j)),
            scratch_shapes=[pltpu.VMEM((tm, tn), jnp.float32)],
        ),
        compiler_params=pltpu.CompilerParams(
            dimension_semantics=("parallel", "parallel", "arbitrary")),
    )(x_col, w_mat, scale2, shift2)

    out = out_flat[:M, :Cout].reshape(B, OH, OW, Cout)
    return jnp.transpose(out, (0, 3, 1, 2))                       # back to NCHW


def conv2d_bn_activ_reference(x, weight, conv_bias=None, bn_gamma=None,
                              bn_beta=None, bn_mean=None, bn_var=None, *,
                              stride=1, padding=0, use_bn=True,
                              activ="relu", eps=1e-5):
    """Pure-JAX reference mirroring the PyTorch forward (eval-mode BN)."""
    y = jax.lax.conv_general_dilated(
        x, weight, window_strides=(stride, stride),
        padding=((padding, padding), (padding, padding)),
        dimension_numbers=("NCHW", "OIHW", "NCHW"))
    if conv_bias is not None:
        y = y + conv_bias.reshape(1, -1, 1, 1)
    if use_bn:
        y = ((y - bn_mean.reshape(1, -1, 1, 1))
             / jnp.sqrt(bn_var.reshape(1, -1, 1, 1) + eps)
             * bn_gamma.reshape(1, -1, 1, 1)
             + bn_beta.reshape(1, -1, 1, 1))
    return _ACTIVATIONS[activ](y)


if __name__ == "__main__":
    key = jax.random.PRNGKey(0)
    kx, kw, kg, kb, km, kv, kbias = jax.random.split(key, 7)

    # Case 1: Conv2dBNActiv(4, 8, kernel_size=3, stride=1, padding=1,
    #                       bias=False, use_bn=True, activ='relu')
    B, Cin, H, W = 2, 4, 16, 16
    Cout, KH, KW = 8, 3, 3

    x = jax.random.normal(kx, (B, Cin, H, W), dtype=jnp.float32)
    weight = jax.random.normal(kw, (Cout, Cin, KH, KW), dtype=jnp.float32) * 0.1
    gamma = 1.0 + 0.1 * jax.random.normal(kg, (Cout,), dtype=jnp.float32)
    beta = 0.1 * jax.random.normal(kb, (Cout,), dtype=jnp.float32)
    running_mean = 0.1 * jax.random.normal(km, (Cout,), dtype=jnp.float32)
    running_var = jnp.abs(jax.random.normal(kv, (Cout,), dtype=jnp.float32)) + 0.5

    out = conv2d_bn_activ(
        x, weight, None, gamma, beta, running_mean, running_var,
        stride=1, padding=1, use_bn=True, activ="relu")
    out = jax.block_until_ready(out)
    ref = conv2d_bn_activ_reference(
        x, weight, None, gamma, beta, running_mean, running_var,
        stride=1, padding=1, use_bn=True, activ="relu")
    assert out.shape == (B, Cout, H, W), out.shape
    assert jnp.allclose(out, ref, atol=1e-4, rtol=1e-4), (
        f"max err {jnp.max(jnp.abs(out - ref))}")

    # Case 2: stride-2, biased conv, no BN, tanh activation (exercises the
    # other config paths of the module).
    bias = 0.1 * jax.random.normal(kbias, (Cout,), dtype=jnp.float32)
    out2 = conv2d_bn_activ(
        x, weight, bias, stride=2, padding=1, use_bn=False, activ="tanh")
    out2 = jax.block_until_ready(out2)
    ref2 = conv2d_bn_activ_reference(
        x, weight, bias, stride=2, padding=1, use_bn=False, activ="tanh")
    assert out2.shape == (B, Cout, H // 2, W // 2), out2.shape
    assert jnp.allclose(out2, ref2, atol=1e-4, rtol=1e-4), (
        f"max err {jnp.max(jnp.abs(out2 - ref2))}")

    print("KERNEL_OK")
</pallas_src>

<mosaic_0001>
module attributes {stable_mosaic.version = 11 : i64} {
  func.func @conv_bn_act_kernel(%arg0: i32, %arg1: i32, %arg2: i32, %arg3: memref<256x36xf32, #tpu.memory_space<vmem>>, %arg4: memref<36x8xf32, #tpu.memory_space<vmem>>, %arg5: memref<1x8xf32, #tpu.memory_space<vmem>>, %arg6: memref<1x8xf32, #tpu.memory_space<vmem>>, %arg7: memref<256x8xf32, #tpu.memory_space<vmem>>, %arg8: memref<256x8xf32, #tpu.memory_space<vmem>>) attributes {dimension_semantics = [#tpu.dimension_semantics<parallel>, #tpu.dimension_semantics<parallel>, #tpu.dimension_semantics<arbitrary>], iteration_bounds = array<i64: 2, 1, 1>, scalar_prefetch = 0 : i64, scratch_operands = 1 : i64, tpu.core_type = #tpu.core_type<tc>, window_params = [{transform_indices = @transform_0, window_bounds = array<i64: 256, 36>}, {transform_indices = @transform_1, window_bounds = array<i64: 36, 8>}, {transform_indices = @transform_2, window_bounds = array<i64: 1, 8>}, {transform_indices = @transform_3, window_bounds = array<i64: 1, 8>}, {transform_indices = @transform_4, window_bounds = array<i64: 256, 8>}]} {
    %c0_i32 = arith.constant 0 : i32
    %0 = arith.cmpi eq, %arg2, %c0_i32 : i32
    %1 = arith.extui %0 : i1 to i32
    %c0_i32_0 = arith.constant 0 : i32
    %2 = arith.cmpi ne, %1, %c0_i32_0 : i32
    scf.if %2 {
      %cst_10 = arith.constant 0.000000e+00 : f32
      %12 = vector.broadcast %cst_10 : f32 to vector<256x8xf32>
      %c0_11 = arith.constant 0 : index
      %c0_12 = arith.constant 0 : index
      %13 = vector.load %arg8[%c0_11, %c0_12] : memref<256x8xf32, #tpu.memory_space<vmem>>, vector<256x8xf32>
      tpu.vector_store %arg8[%c0_11, %c0_12], %12 {strides = array<i32>} : memref<256x8xf32, #tpu.memory_space<vmem>>, vector<256x8xf32>,
    } else {
    }
    %c0 = arith.constant 0 : index
    %c0_1 = arith.constant 0 : index
    %3 = vector.load %arg8[%c0, %c0_1] : memref<256x8xf32, #tpu.memory_space<vmem>>, vector<256x8xf32>
    %c0_2 = arith.constant 0 : index
    %c0_3 = arith.constant 0 : index
    %4 = vector.load %arg3[%c0_2, %c0_3] : memref<256x36xf32, #tpu.memory_space<vmem>>, vector<256x36xf32>
    %c0_4 = arith.constant 0 : index
    %c0_5 = arith.constant 0 : index
    %5 = vector.load %arg4[%c0_4, %c0_5] : memref<36x8xf32, #tpu.memory_space<vmem>>, vector<36x8xf32>
    %cst = arith.constant dense<0.000000e+00> : vector<256x8xf32>
    %6 = tpu.matmul %4, %5, %cst {dimension_numbers = #tpu.dot_dimension_numbers<[1], [0], [0], [1], [0, 0, 1, 1], [], []>} : vector<256x36xf32>, vector<36x8xf32>, vector<256x8xf32> -> vector<256x8xf32>
    %7 = arith.addf %3, %6 : vector<256x8xf32>
    %c0_6 = arith.constant 0 : index
    %c0_7 = arith.constant 0 : index
    %8 = vector.load %arg8[%c0_6, %c0_7] : memref<256x8xf32, #tpu.memory_space<vmem>>, vector<256x8xf32>
    tpu.vector_store %arg8[%c0_6, %c0_7], %7 {strides = array<i32>} : memref<256x8xf32, #tpu.memory_space<vmem>>, vector<256x8xf32>,
    %c0_i32_8 = arith.constant 0 : i32
    %9 = arith.cmpi eq, %arg2, %c0_i32_8 : i32
    %10 = arith.extui %9 : i1 to i32
    %c0_i32_9 = arith.constant 0 : i32
    %11 = arith.cmpi ne, %10, %c0_i32_9 : i32
    scf.if %11 {
      %c0_10 = arith.constant 0 : index
      %c0_11 = arith.constant 0 : index
      %12 = vector.load %arg8[%c0_10, %c0_11] : memref<256x8xf32, #tpu.memory_space<vmem>>, vector<256x8xf32>
      %c0_12 = arith.constant 0 : index
      %c0_13 = arith.constant 0 : index
      %13 = vector.load %arg5[%c0_12, %c0_13] : memref<1x8xf32, #tpu.memory_space<vmem>>, vector<1x8xf32>
      %14 = vector.broadcast %13 : vector<1x8xf32> to vector<256x8xf32>
      %15 = arith.mulf %12, %14 : vector<256x8xf32>
      %c0_14 = arith.constant 0 : index
      %c0_15 = arith.constant 0 : index
      %16 = vector.load %arg6[%c0_14, %c0_15] : memref<1x8xf32, #tpu.memory_space<vmem>>, vector<1x8xf32>
      %17 = vector.broadcast %16 : vector<1x8xf32> to vector<256x8xf32>
      %18 = arith.addf %15, %17 : vector<256x8xf32>
      %cst_16 = arith.constant 0.000000e+00 : f32
      %19 = vector.broadcast %cst_16 : f32 to vector<256x8xf32>
      %20 = arith.maximumf %18, %19 : vector<256x8xf32>
      %c0_17 = arith.constant 0 : index
      %c0_18 = arith.constant 0 : index
      %21 = vector.load %arg7[%c0_17, %c0_18] : memref<256x8xf32, #tpu.memory_space<vmem>>, vector<256x8xf32>
      tpu.vector_store %arg7[%c0_17, %c0_18], %20 {strides = array<i32>} : memref<256x8xf32, #tpu.memory_space<vmem>>, vector<256x8xf32>,
    } else {
    }
    return
  }
  func.func @transform_0(%arg0: i32, %arg1: i32, %arg2: i32) -> (i32, i32) {
    %c0_i32 = arith.constant 0 : i32
    return %arg0, %arg2 : i32, i32
  }
  func.func @transform_1(%arg0: i32, %arg1: i32, %arg2: i32) -> (i32, i32) {
    %c0_i32 = arith.constant 0 : i32
    return %arg2, %arg1 : i32, i32
  }
  func.func @transform_2(%arg0: i32, %arg1: i32, %arg2: i32) -> (i32, i32) {
    %c0_i32 = arith.constant 0 : i32
    %c0_i32_0 = arith.constant 0 : i32
    return %c0_i32, %arg1 : i32, i32
  }
  func.func @transform_3(%arg0: i32, %arg1: i32, %arg2: i32) -> (i32, i32) {
    %c0_i32 = arith.constant 0 : i32
    %c0_i32_0 = arith.constant 0 : i32
    return %c0_i32, %arg1 : i32, i32
  }
  func.func @transform_4(%arg0: i32, %arg1: i32, %arg2: i32) -> (i32, i32) {
    %c0_i32 = arith.constant 0 : i32
    return %arg0, %arg1 : i32, i32
  }
}

</mosaic_0001>

<llo_original>
// kernel: tpu_custom_call.1
$region0: #{tpu_custom_call.1}
  #allocation0 [shape = 'u32[]', space=smem, size = 0x4, offset = 0x4, fixed_abs, tag = 'smem constant byte address 0x4 - core index']
  #allocation1 [shape = 'u32[72,128]{1,0:T(1,128)}', space=vmem, size = 0x9000, scoped, tag = 'internal scratch']
  #allocation2 [shape = 'f32[256,8]{1,0:T(8,128)}', space=vmem, size = 0x20000, scoped, tag = 'scratch operand']
  %s0 = inlined_call_operand.vmem [shape: f32[512,36], index: 0, kind: input, shape index: {}]
  %s1 = inlined_call_operand.vmem [shape: f32[36,8], index: 1, kind: input, shape index: {}]
  %s2 = inlined_call_operand.vmem [shape: f32[1,8], index: 2, kind: input, shape index: {}]
  %s3 = inlined_call_operand.vmem [shape: f32[1,8], index: 3, kind: input, shape index: {}]
  %s4 = inlined_call_operand.vmem [shape: f32[512,8], index: 4, kind: output, shape index: {}]
  %s5 = sld [smem:[#allocation0]]
  $region57: #{tpu_custom_call.1} parent=0
    _
  %s7 = ssub.s32 1, %s5
  %s8 = scalar_select 0, %s7, %s5
  loop: start=0, step=1, limit=4
  $region2: #{tpu_custom_call.1} parent=0 // loop_pre_header
    _
  $region3: #{tpu_custom_call.1} parent=0 // loop_header
    %s10 = sphi 0, %s14
    %p11 = scmp.ge.s32.totalorder %s10, 4
    %s17 = sphi 0, %s36
    %s18 = sphi 0, %s32
    %s19 = sphi 0, %s28
    %s20 = sphi 0, %s17
    %s21 = sphi 0, %s18
    %s22 = sphi 0, %s19
    %s23 = sphi 0, %s20
    %s24 = sphi 0, %s21
    %s25 = sphi 0, %s22
    %s41 = sphi 0, %s43
    %s44 = sphi 0, %s41
    %s45 = sphi 0, %s44
    %s61 = sphi 0, %s45
    %s69 = sphi 0, %s71
    %s72 = sphi 0, %s69
    %s73 = sphi 0, %s72
    %s89 = sphi 0, %s73
    %s95 = sphi 0, %s97
    %s98 = sphi 0, %s95
    %s99 = sphi 0, %s98
    %s115 = sphi 0, %s99
    %s121 = sphi 0, %s123
    %s124 = sphi 0, %s121
    %s125 = sphi 0, %s124
    %s141 = sphi 0, %s125
    %s149 = sphi 0, %s151
    %s152 = sphi 0, %s149
    %s153 = sphi 0, %s152
    %s169 = sphi 0, %s153
  $region4: #{tpu_custom_call.1} parent=0 // loop_header_branch
    %13 = sbr.rel (%p11) target = $region8
  $region5: #{tpu_custom_call.1} parent=0 // loop_body
    %s15 = ssub.s32 %s10, 1
    %s16 = ssub.s32 %s10, 2
    %s26 = sadd.s32 1, %s19
    %p27 = scmp.ge.s32.totalorder %s26, 1
    %s28 = scalar_select %p27, 0, %s26
    %s29 = sadd.s32 1, %s18
    %s30 = scalar_select %p27, %s29, %s18
    %p31 = scmp.ge.s32.totalorder %s30, 1
    %s32 = scalar_select %p31, 0, %s30
    %s33 = sadd.s32 1, %s17
    %s34 = scalar_select %p31, %s33, %s17
    %p35 = scmp.ge.s32.totalorder %s34, 2
    %s36 = scalar_select %p35, 0, %s34
    %s37 = ssub.s32 %s17, %s36
    %s38 = ssub.s32 %s19, %s28
    %s39 = sor.u32 %s37, %s38
    %p40 = scmp.eq.s32.totalorder %s39, 0
    %s42 = sadd.s32 %s41, 1
    %s43 = scalar_select %p40, %s41, %s42
    %p46 = pneg %p40
    %p47 = scmp.eq.s32.totalorder %s10, 1
    %p48 = por %p46, %p47
    %p49 = scmp.ne.s32.totalorder %s41, %s44
    %p50 = scmp.eq.s32.totalorder %s10, 0
    %p51 = por %p49, %p50
    %p52 = scmp.ne.s32.totalorder %s41, %s44
    %p53 = scmp.eq.s32.totalorder %s15, 1
    %p54 = por %p52, %p53
    %p55 = scmp.ne.s32.totalorder %s44, %s45
    %p56 = scmp.eq.s32.totalorder %s15, 0
    %p57 = por %p55, %p56
    %p58 = scmp.ne.s32.totalorder %s44, %s45
    %p59 = scmp.eq.s32.totalorder %s16, 1
    %p60 = por %p58, %p59
    %p62 = scmp.ne.s32.totalorder %s45, %s61
    %p63 = scmp.eq.s32.totalorder %s16, 0
    %p64 = por %p62, %p63
    %s65 = ssub.s32 %s19, %s28
    %s66 = ssub.s32 %s18, %s32
    %s67 = sor.u32 %s65, %s66
    %p68 = scmp.eq.s32.totalorder %s67, 0
    %s70 = sadd.s32 %s69, 1
    %s71 = scalar_select %p68, %s69, %s70
    %p74 = pneg %p68
    %p75 = scmp.eq.s32.totalorder %s10, 1
    %p76 = por %p74, %p75
    %p77 = scmp.ne.s32.totalorder %s69, %s72
    %p78 = scmp.eq.s32.totalorder %s10, 0
    %p79 = por %p77, %p78
    %p80 = scmp.ne.s32.totalorder %s69, %s72
    %p81 = scmp.eq.s32.totalorder %s15, 1
    %p82 = por %p80, %p81
    %p83 = scmp.ne.s32.totalorder %s72, %s73
    %p84 = scmp.eq.s32.totalorder %s15, 0
    %p85 = por %p83, %p84
    %p86 = scmp.ne.s32.totalorder %s72, %s73
    %p87 = scmp.eq.s32.totalorder %s16, 1
    %p88 = por %p86, %p87
    %p90 = scmp.ne.s32.totalorder %s73, %s89
    %p91 = scmp.eq.s32.totalorder %s16, 0
    %p92 = por %p90, %p91
    %s93 = ssub.s32 %s18, %s32
    %p94 = scmp.eq.s32.totalorder %s93, 0
    %s96 = sadd.s32 %s95, 1
    %s97 = scalar_select %p94, %s95, %s96
    %p100 = pneg %p94
    %p101 = scmp.eq.s32.totalorder %s10, 1
    %p102 = por %p100, %p101
    %p103 = scmp.ne.s32.totalorder %s95, %s98
    %p104 = scmp.eq.s32.totalorder %s10, 0
    %p105 = por %p103, %p104
    %p106 = scmp.ne.s32.totalorder %s95, %s98
    %p107 = scmp.eq.s32.totalorder %s15, 1
    %p108 = por %p106, %p107
    %p109 = scmp.ne.s32.totalorder %s98, %s99
    %p110 = scmp.eq.s32.totalorder %s15, 0
    %p111 = por %p109, %p110
    %p112 = scmp.ne.s32.totalorder %s98, %s99
    %p113 = scmp.eq.s32.totalorder %s16, 1
    %p114 = por %p112, %p113
    %p116 = scmp.ne.s32.totalorder %s99, %s115
    %p117 = scmp.eq.s32.totalorder %s16, 0
    %p118 = por %p116, %p117
    %s119 = ssub.s32 %s18, %s32
    %p120 = scmp.eq.s32.totalorder %s119, 0
    %s122 = sadd.s32 %s121, 1
    %s123 = scalar_select %p120, %s121, %s122
    %p126 = pneg %p120
    %p127 = scmp.eq.s32.totalorder %s10, 1
    %p128 = por %p126, %p127
    %p129 = scmp.ne.s32.totalorder %s121, %s124
    %p130 = scmp.eq.s32.totalorder %s10, 0
    %p131 = por %p129, %p130
    %p132 = scmp.ne.s32.totalorder %s121, %s124
    %p133 = scmp.eq.s32.totalorder %s15, 1
    %p134 = por %p132, %p133
    %p135 = scmp.ne.s32.totalorder %s124, %s125
    %p136 = scmp.eq.s32.totalorder %s15, 0
    %p137 = por %p135, %p136
    %p138 = scmp.ne.s32.totalorder %s124, %s125
    %p139 = scmp.eq.s32.totalorder %s16, 1
    %p140 = por %p138, %p139
    %p142 = scmp.ne.s32.totalorder %s125, %s141
    %p143 = scmp.eq.s32.totalorder %s16, 0
    %p144 = por %p142, %p143
    %s145 = ssub.s32 %s17, %s36
    %s146 = ssub.s32 %s18, %s32
    %s147 = sor.u32 %s145, %s146
    %p148 = scmp.eq.s32.totalorder %s147, 0
    %s150 = sadd.s32 %s149, 1
    %s151 = scalar_select %p148, %s149, %s150
    %p154 = pneg %p148
    %p155 = scmp.eq.s32.totalorder %s10, 1
    %p156 = por %p154, %p155
    %p157 = scmp.ne.s32.totalorder %s149, %s152
    %p158 = scmp.eq.s32.totalorder %s10, 0
    %p159 = por %p157, %p158
    %p160 = scmp.ne.s32.totalorder %s149, %s152
    %p161 = scmp.eq.s32.totalorder %s15, 1
    %p162 = por %p160, %p161
    %p163 = scmp.ne.s32.totalorder %s152, %s153
    %p164 = scmp.eq.s32.totalorder %s15, 0
    %p165 = por %p163, %p164
    %p166 = scmp.ne.s32.totalorder %s152, %s153
    %p167 = scmp.eq.s32.totalorder %s16, 1
    %p168 = por %p166, %p167
    %p170 = scmp.ne.s32.totalorder %s153, %s169
    %p171 = scmp.eq.s32.totalorder %s16, 0
    %p172 = por %p170, %p171
    %p173 = scmp.le.s32.totalorder 1, %s10
    %p174 = scmp.lt.s32.totalorder %s10, 3
    %p175 = pnand %p173, %p174
    %p176 = pneg %p175
    // Predicated region
    $region9: #{tpu_custom_call.1} parent=5 // pred_check
      _
    $region10: #{tpu_custom_call.1} parent=5 // pred_check_branch
      %178 = sbr.rel (%p175) target = $region12
    $region11: #{tpu_custom_call.1} parent=5 // pred_region
      %s179 = ssub.s32 %s10, 1
      // Predicated region
      $region13: #{tpu_custom_call.1} parent=11 // pred_check
        %p180 = pneg %p85
      $region14: #{tpu_custom_call.1} parent=11 // pred_check_branch
        %182 = sbr.rel (%p180) target = $region16
      $region15: #{tpu_custom_call.1} parent=11 // pred_region
        %s183 = smul.u32 5, %s22
        %p184 = scmp.lt.s32.totalorder %s183, 4
        %s185 = scalar_select %p184, %s183, 4
        %p186 = scmp.lt.s32.totalorder %s21, 0
        %s187 = scalar_select %p186, %s21, 0
        %s188 = sadd.s32 %s187, %s185
        %s189 = smul.addr %s188, 8
        %s190 = scalar_lea.vmem %s1, %s189
        %s191 = smul.u32 5, %s22
      $region16: #{tpu_custom_call.1} parent=11 // pred_fallthru
        _
      // Predicated region
      $region17: #{tpu_custom_call.1} parent=11 // pred_check
        %p192 = pneg %p111
      $region18: #{tpu_custom_call.1} parent=11 // pred_check_branch
        %194 = sbr.rel (%p192) target = $region20
      $region19: #{tpu_custom_call.1} parent=11 // pred_region
        %p195 = scmp.lt.s32.totalorder %s21, 0
        %s196 = scalar_select %p195, %s21, 0
        %s197 = scalar_lea.vmem %s2, %s196
      $region20: #{tpu_custom_call.1} parent=11 // pred_fallthru
        _
      // Predicated region
      $region21: #{tpu_custom_call.1} parent=11 // pred_check
        %p198 = pneg %p137
      $region22: #{tpu_custom_call.1} parent=11 // pred_check_branch
        %200 = sbr.rel (%p198) target = $region24
      $region23: #{tpu_custom_call.1} parent=11 // pred_region
        %p201 = scmp.lt.s32.totalorder %s21, 0
        %s202 = scalar_select %p201, %s21, 0
        %s203 = scalar_lea.vmem %s3, %s202
      $region24: #{tpu_custom_call.1} parent=11 // pred_fallthru
        _
    $region12: #{tpu_custom_call.1} parent=5 // pred_fallthru
      _
    %p204 = scmp.lt.s32.totalorder %s10, 2
    // Predicated region
    $region25: #{tpu_custom_call.1} parent=5 // pred_check
      %p205 = pneg %p204
    $region26: #{tpu_custom_call.1} parent=5 // pred_check_branch
      %207 = sbr.rel (%p205) target = $region28
    $region27: #{tpu_custom_call.1} parent=5 // pred_region
      // Predicated region
      $region29: #{tpu_custom_call.1} parent=27 // pred_check
        %p208 = pneg %p51
      $region30: #{tpu_custom_call.1} parent=27 // pred_check_branch
        %210 = sbr.rel (%p208) target = $region32
      $region31: #{tpu_custom_call.1} parent=27 // pred_region
        %s211 = smul.u32 32, %s17
        %p212 = scmp.lt.s32.totalorder %s211, 63
        %s213 = scalar_select %p212, %s211, 63
        %p214 = scmp.lt.s32.totalorder %s19, 0
        %s215 = scalar_select %p214, %s19, 0
        %s216 = sadd.s32 %s215, %s213
        %s217 = smul.addr %s216, 8
        %s218 = scalar_lea.vmem %s0, %s217
        %s219 = smul.u32 32, %s17
      $region32: #{tpu_custom_call.1} parent=27 // pred_fallthru
        _
    $region28: #{tpu_custom_call.1} parent=5 // pred_fallthru
      _
    %p220 = scmp.le.s32.totalorder 1, %s10
    %p221 = scmp.lt.s32.totalorder %s10, 3
    %p222 = pnand %p220, %p221
    %p223 = pneg %p222
    // Predicated region
    $region33: #{tpu_custom_call.1} parent=5 // pred_check
      _
    $region34: #{tpu_custom_call.1} parent=5 // pred_check_branch
      %225 = sbr.rel (%p222) target = $region36
    $region35: #{tpu_custom_call.1} parent=5 // pred_region
      %s226 = ssub.s32 %s10, 1
      %s227 = smul.u32 32, %s20
      %p228 = scmp.lt.s32.totalorder %s227, 63
      %s229 = scalar_select %p228, %s227, 63
      %p230 = scmp.lt.s32.totalorder %s22, 0
      %s231 = scalar_select %p230, %s22, 0
      %s232 = sadd.s32 %s231, %s229
      %s233 = smul.addr %s232, 8
      %s234 = scalar_lea.vmem %s0, %s233
      %p235 = pneg %p57
      %p236 = pneg %p54
      %s237 = smul.u32 5, %s22
      %p238 = scmp.lt.s32.totalorder %s237, 4
      %s239 = scalar_select %p238, %s237, 4
      %p240 = scmp.lt.s32.totalorder %s21, 0
      %s241 = scalar_select %p240, %s21, 0
      %s242 = sadd.s32 %s241, %s239
      %s243 = smul.addr %s242, 8
      %s244 = scalar_lea.vmem %s1, %s243
      %p245 = pneg %p85
      %p246 = pneg %p82
      %p247 = scmp.lt.s32.totalorder %s21, 0
      %s248 = scalar_select %p247, %s21, 0
      %s249 = scalar_lea.vmem %s2, %s248
      %p250 = pneg %p111
      %p251 = pneg %p108
      %p252 = scmp.lt.s32.totalorder %s21, 0
      %s253 = scalar_select %p252, %s21, 0
      %s254 = scalar_lea.vmem %s3, %s253
      %p255 = pneg %p137
      %p256 = pneg %p134
      %p257 = pneg %p165
      %p258 = pneg %p162
      %s259 = smul.u32 32, %s20
      %p260 = scmp.lt.s32.totalorder %s259, 63
      %s261 = scalar_select %p260, %s259, 63
      %p262 = scmp.lt.s32.totalorder %s21, 0
      %s263 = scalar_select %p262, %s21, 0
      %s264 = sadd.s32 %s263, %s261
      %s265 = smul.addr %s264, 8
      %s266 = scalar_lea.vmem %s4, %s265
      %s267 = smul.u32 32, %s20
      %p268 = scmp.lt.s32.totalorder %s267, 63
      %s269 = scalar_select %p268, %s267, 63
      %p270 = scmp.lt.s32.totalorder %s22, 0
      %s271 = scalar_select %p270, %s22, 0
      %s272 = sadd.s32 %s271, %s269
      %s273 = smul.addr %s272, 8
      %s274 = scalar_lea.vmem %s0, %s273
      %s275 = smul.u32 32, %s20
      %s276 = smul.u32 5, %s22
      %p277 = scmp.lt.s32.totalorder %s276, 4
      %s278 = scalar_select %p277, %s276, 4
      %p279 = scmp.lt.s32.totalorder %s21, 0
      %s280 = scalar_select %p279, %s21, 0
      %s281 = sadd.s32 %s280, %s278
      %s282 = smul.addr %s281, 8
      %s283 = scalar_lea.vmem %s1, %s282
      %s284 = smul.u32 5, %s22
      %p285 = scmp.lt.s32.totalorder %s21, 0
      %s286 = scalar_select %p285, %s21, 0
      %s287 = scalar_lea.vmem %s2, %s286
      %p288 = scmp.lt.s32.totalorder %s21, 0
      %s289 = scalar_select %p288, %s21, 0
      %s290 = scalar_lea.vmem %s3, %s289
      %s291 = smul.u32 32, %s20
      %p292 = scmp.lt.s32.totalorder %s291, 63
      %s293 = scalar_select %p292, %s291, 63
      %p294 = scmp.lt.s32.totalorder %s21, 0
      %s295 = scalar_select %p294, %s21, 0
      %s296 = sadd.s32 %s295, %s293
      %s297 = smul.addr %s296, 8
      %s298 = scalar_lea.vmem %s4, %s297
      %s299 = smul.u32 32, %s20
      %p300 = scmp.eq.s32.totalorder %s22, 0
      // Predicated region
      $region37: #{tpu_custom_call.1} parent=35 // pred_check
        %p301 = pneg %p300
      $region38: #{tpu_custom_call.1} parent=35 // pred_check_branch
        %303 = sbr.rel (%p301) target = $region40
      $region39: #{tpu_custom_call.1} parent=35 // pred_region
        %vm304 = vcmask 64512
        %305 = vst.msk [vmem:[#allocation2] sm:$0xff] %vm304, 0.0
        %306 = vst.msk [vmem:[#allocation2 + $0x8] sm:$0xff] %vm304, 0.0
        %307 = vst.msk [vmem:[#allocation2 + $0x10] sm:$0xff] %vm304, 0.0
        %308 = vst.msk [vmem:[#allocation2 + $0x18] sm:$0xff] %vm304, 0.0
        %309 = vst.msk [vmem:[#allocation2 + $0x20] sm:$0xff] %vm304, 0.0
        %310 = vst.msk [vmem:[#allocation2 + $0x28] sm:$0xff] %vm304, 0.0
        %311 = vst.msk [vmem:[#allocation2 + $0x30] sm:$0xff] %vm304, 0.0
        %312 = vst.msk [vmem:[#allocation2 + $0x38] sm:$0xff] %vm304, 0.0
        %313 = vst.msk [vmem:[#allocation2 + $0x40] sm:$0xff] %vm304, 0.0
        %314 = vst.msk [vmem:[#allocation2 + $0x48] sm:$0xff] %vm304, 0.0
        %315 = vst.msk [vmem:[#allocation2 + $0x50] sm:$0xff] %vm304, 0.0
        %316 = vst.msk [vmem:[#allocation2 + $0x58] sm:$0xff] %vm304, 0.0
        %317 = vst.msk [vmem:[#allocation2 + $0x60] sm:$0xff] %vm304, 0.0
        %318 = vst.msk [vmem:[#allocation2 + $0x68] sm:$0xff] %vm304, 0.0
        %319 = vst.msk [vmem:[#allocation2 + $0x70] sm:$0xff] %vm304, 0.0
        %320 = vst.msk [vmem:[#allocation2 + $0x78] sm:$0xff] %vm304, 0.0
        %321 = vst.msk [vmem:[#allocation2 + $0x80] sm:$0xff] %vm304, 0.0
        %322 = vst.msk [vmem:[#allocation2 + $0x88] sm:$0xff] %vm304, 0.0
        %323 = vst.msk [vmem:[#allocation2 + $0x90] sm:$0xff] %vm304, 0.0
        %324 = vst.msk [vmem:[#allocation2 + $0x98] sm:$0xff] %vm304, 0.0
        %325 = vst.msk [vmem:[#allocation2 + $0xa0] sm:$0xff] %vm304, 0.0
        %326 = vst.msk [vmem:[#allocation2 + $0xa8] sm:$0xff] %vm304, 0.0
        %327 = vst.msk [vmem:[#allocation2 + $0xb0] sm:$0xff] %vm304, 0.0
        %328 = vst.msk [vmem:[#allocation2 + $0xb8] sm:$0xff] %vm304, 0.0
        %329 = vst.msk [vmem:[#allocation2 + $0xc0] sm:$0xff] %vm304, 0.0
        %330 = vst.msk [vmem:[#allocation2 + $0xc8] sm:$0xff] %vm304, 0.0
        %331 = vst.msk [vmem:[#allocation2 + $0xd0] sm:$0xff] %vm304, 0.0
        %332 = vst.msk [vmem:[#allocation2 + $0xd8] sm:$0xff] %vm304, 0.0
        %333 = vst.msk [vmem:[#allocation2 + $0xe0] sm:$0xff] %vm304, 0.0
        %334 = vst.msk [vmem:[#allocation2 + $0xe8] sm:$0xff] %vm304, 0.0
        %335 = vst.msk [vmem:[#allocation2 + $0xf0] sm:$0xff] %vm304, 0.0
        %336 = vst.msk [vmem:[#allocation2 + $0xf8] sm:$0xff] %vm304, 0.0
      $region40: #{tpu_custom_call.1} parent=35 // pred_fallthru
        _
      %v337 = vld [vmem:[#allocation2] sm:$0xff]
      %v338 = vld [vmem:[#allocation2 + $0x8] sm:$0xff]
      %v339 = vld [vmem:[#allocation2 + $0x10] sm:$0xff]
      %v340 = vld [vmem:[#allocation2 + $0x18] sm:$0xff]
      %v341 = vld [vmem:[#allocation2 + $0x20] sm:$0xff]
      %v342 = vld [vmem:[#allocation2 + $0x28] sm:$0xff]
      %v343 = vld [vmem:[#allocation2 + $0x30] sm:$0xff]
      %v344 = vld [vmem:[#allocation2 + $0x38] sm:$0xff]
      %v345 = vld [vmem:[#allocation2 + $0x40] sm:$0xff]
      %v346 = vld [vmem:[#allocation2 + $0x48] sm:$0xff]
      %v347 = vld [vmem:[#allocation2 + $0x50] sm:$0xff]
      %v348 = vld [vmem:[#allocation2 + $0x58] sm:$0xff]
      %v349 = vld [vmem:[#allocation2 + $0x60] sm:$0xff]
      %v350 = vld [vmem:[#allocation2 + $0x68] sm:$0xff]
      %v351 = vld [vmem:[#allocation2 + $0x70] sm:$0xff]
      %v352 = vld [vmem:[#allocation2 + $0x78] sm:$0xff]
      %v353 = vld [vmem:[#allocation2 + $0x80] sm:$0xff]
      %v354 = vld [vmem:[#allocation2 + $0x88] sm:$0xff]
      %v355 = vld [vmem:[#allocation2 + $0x90] sm:$0xff]
      %v356 = vld [vmem:[#allocation2 + $0x98] sm:$0xff]
      %v357 = vld [vmem:[#allocation2 + $0xa0] sm:$0xff]
      %v358 = vld [vmem:[#allocation2 + $0xa8] sm:$0xff]
      %v359 = vld [vmem:[#allocation2 + $0xb0] sm:$0xff]
      %v360 = vld [vmem:[#allocation2 + $0xb8] sm:$0xff]
      %v361 = vld [vmem:[#allocation2 + $0xc0] sm:$0xff]
      %v362 = vld [vmem:[#allocation2 + $0xc8] sm:$0xff]
      %v363 = vld [vmem:[#allocation2 + $0xd0] sm:$0xff]
      %v364 = vld [vmem:[#allocation2 + $0xd8] sm:$0xff]
      %v365 = vld [vmem:[#allocation2 + $0xe0] sm:$0xff]
      %v366 = vld [vmem:[#allocation2 + $0xe8] sm:$0xff]
      %v367 = vld [vmem:[#allocation2 + $0xf0] sm:$0xff]
      %v368 = vld [vmem:[#allocation2 + $0xf8] sm:$0xff]
      %v369 = vld [vmem:[%s274] sm:$0xff]
      %v370 = vld [vmem:[%s274 + $0x8] sm:$0xff]
      %v371 = vld [vmem:[%s274 + $0x10] sm:$0xff]
      %v372 = vld [vmem:[%s274 + $0x18] sm:$0xff]
      %v373 = vld [vmem:[%s274 + $0x20] sm:$0xff]
      %v374 = vld [vmem:[%s274 + $0x28] sm:$0xff]
      %v375 = vld [vmem:[%s274 + $0x30] sm:$0xff]
      %v376 = vld [vmem:[%s274 + $0x38] sm:$0xff]
      %v377 = vld [vmem:[%s274 + $0x40] sm:$0xff]
      %v378 = vld [vmem:[%s274 + $0x48] sm:$0xff]
      %v379 = vld [vmem:[%s274 + $0x50] sm:$0xff]
      %v380 = vld [vmem:[%s274 + $0x58] sm:$0xff]
      %v381 = vld [vmem:[%s274 + $0x60] sm:$0xff]
      %v382 = vld [vmem:[%s274 + $0x68] sm:$0xff]
      %v383 = vld [vmem:[%s274 + $0x70] sm:$0xff]
      %v384 = vld [vmem:[%s274 + $0x78] sm:$0xff]
      %v385 = vld [vmem:[%s274 + $0x80] sm:$0xff]
      %v386 = vld [vmem:[%s274 + $0x88] sm:$0xff]
      %v387 = vld [vmem:[%s274 + $0x90] sm:$0xff]
      %v388 = vld [vmem:[%s274 + $0x98] sm:$0xff]
      %v389 = vld [vmem:[%s274 + $0xa0] sm:$0xff]
      %v390 = vld [vmem:[%s274 + $0xa8] sm:$0xff]
      %v391 = vld [vmem:[%s274 + $0xb0] sm:$0xff]
      %v392 = vld [vmem:[%s274 + $0xb8] sm:$0xff]
      %v393 = vld [vmem:[%s274 + $0xc0] sm:$0xff]
      %v394 = vld [vmem:[%s274 + $0xc8] sm:$0xff]
      %v395 = vld [vmem:[%s274 + $0xd0] sm:$0xff]
      %v396 = vld [vmem:[%s274 + $0xd8] sm:$0xff]
      %v397 = vld [vmem:[%s274 + $0xe0] sm:$0xff]
      %v398 = vld [vmem:[%s274 + $0xe8] sm:$0xff]
      %v399 = vld [vmem:[%s274 + $0xf0] sm:$0xff]
      %v400 = vld [vmem:[%s274 + $0xf8] sm:$0xff]
      %v401 = vld [vmem:[%s283] sm:$0xff]
      %v402 = vld [vmem:[%s283 + $0x8] sm:$0xff]
      %v403 = vld [vmem:[%s283 + $0x10] sm:$0xff]
      %v404 = vld [vmem:[%s283 + $0x18] sm:$0xff]
      %v405 = vld [vmem:[%s283 + $0x20] sm:$0xf]
      %vm406 = vcmask 293888
      %v408 = vsel %vm406, %v369, 0
      %v411 = vsel %vm406, %v370, 0
      %v414 = vsel %vm406, %v371, 0
      %v417 = vsel %vm406, %v372, 0
      %v420 = vsel %vm406, %v373, 0
      %v423 = vsel %vm406, %v374, 0
      %v426 = vsel %vm406, %v375, 0
      %v429 = vsel %vm406, %v376, 0
      %v432 = vsel %vm406, %v377, 0
      %v435 = vsel %vm406, %v378, 0
      %v438 = vsel %vm406, %v379, 0
      %v441 = vsel %vm406, %v380, 0
      %v444 = vsel %vm406, %v381, 0
      %v447 = vsel %vm406, %v382, 0
      %v450 = vsel %vm406, %v383, 0
      %v453 = vsel %vm406, %v384, 0
      %v456 = vsel %vm406, %v385, 0
      %v459 = vsel %vm406, %v386, 0
      %v462 = vsel %vm406, %v387, 0
      %v465 = vsel %vm406, %v388, 0
      %v468 = vsel %vm406, %v389, 0
      %v471 = vsel %vm406, %v390, 0
      %v474 = vsel %vm406, %v391, 0
      %v477 = vsel %vm406, %v392, 0
      %v480 = vsel %vm406, %v393, 0
      %v483 = vsel %vm406, %v394, 0
      %v486 = vsel %vm406, %v395, 0
      %v489 = vsel %vm406, %v396, 0
      %v492 = vsel %vm406, %v397, 0
      %v495 = vsel %vm406, %v398, 0
      %v498 = vsel %vm406, %v399, 0
      %v501 = vsel %vm406, %v400, 0
      %vm503 = vcmask 1043456
      %v505 = vsel %vm503, %v405, 0
      %507 = vmatpush.msra.mxu0 0.0
      %508 = vmatpush.msra.mxu0 0.0
      %509 = vmatpush.msra.mxu0 0.0
      %510 = vmatpush.msra.mxu0 0.0
      %511 = vmatpush.msra.mxu0 0.0
      %512 = vmatpush.msra.mxu0 0.0
      %513 = vmatpush.msra.mxu0 0.0
      %514 = vmatpush.msra.mxu0 0.0
      %515 = vmatpush.msra.mxu0 0.0
      %516 = vmatpush.msra.mxu0 0.0
      %517 = vmatpush.msra.mxu0 0.0
      %518 = vmatpush.msra.mxu0 %v505
      %519 = vmatpush.msra.mxu0 %v404
      %520 = vmatpush.msra.mxu0 %v403
      %521 = vmatpush.msra.mxu0 %v402
      %522 = vmatpush.msra.mxu0 %v401
      %523 = vmatmul.f32.gmra.mxu0 %v408
      %v524 = vpop.f32.mrf.mxu0
      %v525 = vadd.f32 0.0, %v524
      %526 = vmatmul.f32.gmra.mxu0 %v411
      %v527 = vpop.f32.mrf.mxu0
      %v528 = vadd.f32 0.0, %v527
      %529 = vmatmul.f32.gmra.mxu0 %v414
      %v530 = vpop.f32.mrf.mxu0
      %v531 = vadd.f32 0.0, %v530
      %532 = vmatmul.f32.gmra.mxu0 %v417
      %v533 = vpop.f32.mrf.mxu0
      %v534 = vadd.f32 0.0, %v533
      %535 = vmatmul.f32.gmra.mxu0 %v420
      %v536 = vpop.f32.mrf.mxu0
      %v537 = vadd.f32 0.0, %v536
      %538 = vmatmul.f32.gmra.mxu0 %v423
      %v539 = vpop.f32.mrf.mxu0
      %v540 = vadd.f32 0.0, %v539
      %541 = vmatmul.f32.gmra.mxu0 %v426
      %v542 = vpop.f32.mrf.mxu0
      %v543 = vadd.f32 0.0, %v542
      %544 = vmatmul.f32.gmra.mxu0 %v429
      %v545 = vpop.f32.mrf.mxu0
      %v546 = vadd.f32 0.0, %v545
      %547 = vmatmul.f32.gmra.mxu0 %v432
      %v548 = vpop.f32.mrf.mxu0
      %v549 = vadd.f32 0.0, %v548
      %550 = vmatmul.f32.gmra.mxu0 %v435
      %v551 = vpop.f32.mrf.mxu0
      %v552 = vadd.f32 0.0, %v551
      %553 = vmatmul.f32.gmra.mxu0 %v438
      %v554 = vpop.f32.mrf.mxu0
      %v555 = vadd.f32 0.0, %v554
      %556 = vmatmul.f32.gmra.mxu0 %v441
      %v557 = vpop.f32.mrf.mxu0
      %v558 = vadd.f32 0.0, %v557
      %559 = vmatmul.f32.gmra.mxu0 %v444
      %v560 = vpop.f32.mrf.mxu0
      %v561 = vadd.f32 0.0, %v560
      %562 = vmatmul.f32.gmra.mxu0 %v447
      %v563 = vpop.f32.mrf.mxu0
      %v564 = vadd.f32 0.0, %v563
      %565 = vmatmul.f32.gmra.mxu0 %v450
      %v566 = vpop.f32.mrf.mxu0
      %v567 = vadd.f32 0.0, %v566
      %568 = vmatmul.f32.gmra.mxu0 %v453
      %v569 = vpop.f32.mrf.mxu0
      %v570 = vadd.f32 0.0, %v569
      %571 = vmatmul.f32.gmra.mxu0 %v456
      %v572 = vpop.f32.mrf.mxu0
      %v573 = vadd.f32 0.0, %v572
      %574 = vmatmul.f32.gmra.mxu0 %v459
      %v575 = vpop.f32.mrf.mxu0
      %v576 = vadd.f32 0.0, %v575
      %577 = vmatmul.f32.gmra.mxu0 %v462
      %v578 = vpop.f32.mrf.mxu0
      %v579 = vadd.f32 0.0, %v578
      %580 = vmatmul.f32.gmra.mxu0 %v465
      %v581 = vpop.f32.mrf.mxu0
      %v582 = vadd.f32 0.0, %v581
      %583 = vmatmul.f32.gmra.mxu0 %v468
      %v584 = vpop.f32.mrf.mxu0
      %v585 = vadd.f32 0.0, %v584
      %586 = vmatmul.f32.gmra.mxu0 %v471
      %v587 = vpop.f32.mrf.mxu0
      %v588 = vadd.f32 0.0, %v587
      %589 = vmatmul.f32.gmra.mxu0 %v474
      %v590 = vpop.f32.mrf.mxu0
      %v591 = vadd.f32 0.0, %v590
      %592 = vmatmul.f32.gmra.mxu0 %v477
      %v593 = vpop.f32.mrf.mxu0
      %v594 = vadd.f32 0.0, %v593
      %595 = vmatmul.f32.gmra.mxu0 %v480
      %v596 = vpop.f32.mrf.mxu0
      %v597 = vadd.f32 0.0, %v596
      %598 = vmatmul.f32.gmra.mxu0 %v483
      %v599 = vpop.f32.mrf.mxu0
      %v600 = vadd.f32 0.0, %v599
      %601 = vmatmul.f32.gmra.mxu0 %v486
      %v602 = vpop.f32.mrf.mxu0
      %v603 = vadd.f32 0.0, %v602
      %604 = vmatmul.f32.gmra.mxu0 %v489
      %v605 = vpop.f32.mrf.mxu0
      %v606 = vadd.f32 0.0, %v605
      %607 = vmatmul.f32.gmra.mxu0 %v492
      %v608 = vpop.f32.mrf.mxu0
      %v609 = vadd.f32 0.0, %v608
      %610 = vmatmul.f32.gmra.mxu0 %v495
      %v611 = vpop.f32.mrf.mxu0
      %v612 = vadd.f32 0.0, %v611
      %613 = vmatmul.f32.gmra.mxu0 %v498
      %v614 = vpop.f32.mrf.mxu0
      %v615 = vadd.f32 0.0, %v614
      %616 = vmatmul.f32.gmra.mxu0 %v501
      %v617 = vpop.f32.mrf.mxu0
      %v618 = vadd.f32 0.0, %v617
      %619 = vdwg.mxu0
      %v620 = vadd.f32 %v337, %v525
      %v621 = vadd.f32 %v338, %v528
      %v622 = vadd.f32 %v339, %v531
      %v623 = vadd.f32 %v340, %v534
      %v624 = vadd.f32 %v341, %v537
      %v625 = vadd.f32 %v342, %v540
      %v626 = vadd.f32 %v343, %v543
      %v627 = vadd.f32 %v344, %v546
      %v628 = vadd.f32 %v345, %v549
      %v629 = vadd.f32 %v346, %v552
      %v630 = vadd.f32 %v347, %v555
      %v631 = vadd.f32 %v348, %v558
      %v632 = vadd.f32 %v349, %v561
      %v633 = vadd.f32 %v350, %v564
      %v634 = vadd.f32 %v351, %v567
      %v635 = vadd.f32 %v352, %v570
      %v636 = vadd.f32 %v353, %v573
      %v637 = vadd.f32 %v354, %v576
      %v638 = vadd.f32 %v355, %v579
      %v639 = vadd.f32 %v356, %v582
      %v640 = vadd.f32 %v357, %v585
      %v641 = vadd.f32 %v358, %v588
      %v642 = vadd.f32 %v359, %v591
      %v643 = vadd.f32 %v360, %v594
      %v644 = vadd.f32 %v361, %v597
      %v645 = vadd.f32 %v362, %v600
      %v646 = vadd.f32 %v363, %v603
      %v647 = vadd.f32 %v364, %v606
      %v648 = vadd.f32 %v365, %v609
      %v649 = vadd.f32 %v366, %v612
      %v650 = vadd.f32 %v367, %v615
      %v651 = vadd.f32 %v368, %v618
      %vm652 = vcmask 64512
      %653 = vst.msk [vmem:[#allocation2] sm:$0xff] %vm652, %v620
      %654 = vst.msk [vmem:[#allocation2 + $0x8] sm:$0xff] %vm652, %v621
      %655 = vst.msk [vmem:[#allocation2 + $0x10] sm:$0xff] %vm652, %v622
      %656 = vst.msk [vmem:[#allocation2 + $0x18] sm:$0xff] %vm652, %v623
      %657 = vst.msk [vmem:[#allocation2 + $0x20] sm:$0xff] %vm652, %v624
      %658 = vst.msk [vmem:[#allocation2 + $0x28] sm:$0xff] %vm652, %v625
      %659 = vst.msk [vmem:[#allocation2 + $0x30] sm:$0xff] %vm652, %v626
      %660 = vst.msk [vmem:[#allocation2 + $0x38] sm:$0xff] %vm652, %v627
      %661 = vst.msk [vmem:[#allocation2 + $0x40] sm:$0xff] %vm652, %v628
      %662 = vst.msk [vmem:[#allocation2 + $0x48] sm:$0xff] %vm652, %v629
      %663 = vst.msk [vmem:[#allocation2 + $0x50] sm:$0xff] %vm652, %v630
      %664 = vst.msk [vmem:[#allocation2 + $0x58] sm:$0xff] %vm652, %v631
      %665 = vst.msk [vmem:[#allocation2 + $0x60] sm:$0xff] %vm652, %v632
      %666 = vst.msk [vmem:[#allocation2 + $0x68] sm:$0xff] %vm652, %v633
      %667 = vst.msk [vmem:[#allocation2 + $0x70] sm:$0xff] %vm652, %v634
      %668 = vst.msk [vmem:[#allocation2 + $0x78] sm:$0xff] %vm652, %v635
      %669 = vst.msk [vmem:[#allocation2 + $0x80] sm:$0xff] %vm652, %v636
      %670 = vst.msk [vmem:[#allocation2 + $0x88] sm:$0xff] %vm652, %v637
      %671 = vst.msk [vmem:[#allocation2 + $0x90] sm:$0xff] %vm652, %v638
      %672 = vst.msk [vmem:[#allocation2 + $0x98] sm:$0xff] %vm652, %v639
      %673 = vst.msk [vmem:[#allocation2 + $0xa0] sm:$0xff] %vm652, %v640
      %674 = vst.msk [vmem:[#allocation2 + $0xa8] sm:$0xff] %vm652, %v641
      %675 = vst.msk [vmem:[#allocation2 + $0xb0] sm:$0xff] %vm652, %v642
      %676 = vst.msk [vmem:[#allocation2 + $0xb8] sm:$0xff] %vm652, %v643
      %677 = vst.msk [vmem:[#allocation2 + $0xc0] sm:$0xff] %vm652, %v644
      %678 = vst.msk [vmem:[#allocation2 + $0xc8] sm:$0xff] %vm652, %v645
      %679 = vst.msk [vmem:[#allocation2 + $0xd0] sm:$0xff] %vm652, %v646
      %680 = vst.msk [vmem:[#allocation2 + $0xd8] sm:$0xff] %vm652, %v647
      %681 = vst.msk [vmem:[#allocation2 + $0xe0] sm:$0xff] %vm652, %v648
      %682 = vst.msk [vmem:[#allocation2 + $0xe8] sm:$0xff] %vm652, %v649
      %683 = vst.msk [vmem:[#allocation2 + $0xf0] sm:$0xff] %vm652, %v650
      %684 = vst.msk [vmem:[#allocation2 + $0xf8] sm:$0xff] %vm652, %v651
      // Predicated region
      $region41: #{tpu_custom_call.1} parent=35 // pred_check
        %p685 = pneg %p300
      $region42: #{tpu_custom_call.1} parent=35 // pred_check_branch
        %687 = sbr.rel (%p685) target = $region44
      $region43: #{tpu_custom_call.1} parent=35 // pred_region
        %v688 = vld [vmem:[#allocation2] sm:$0xff]
        %v689 = vld [vmem:[#allocation2 + $0x8] sm:$0xff]
        %v690 = vld [vmem:[#allocation2 + $0x10] sm:$0xff]
        %v691 = vld [vmem:[#allocation2 + $0x18] sm:$0xff]
        %v692 = vld [vmem:[#allocation2 + $0x20] sm:$0xff]
        %v693 = vld [vmem:[#allocation2 + $0x28] sm:$0xff]
        %v694 = vld [vmem:[#allocation2 + $0x30] sm:$0xff]
        %v695 = vld [vmem:[#allocation2 + $0x38] sm:$0xff]
        %v696 = vld [vmem:[#allocation2 + $0x40] sm:$0xff]
        %v697 = vld [vmem:[#allocation2 + $0x48] sm:$0xff]
        %v698 = vld [vmem:[#allocation2 + $0x50] sm:$0xff]
        %v699 = vld [vmem:[#allocation2 + $0x58] sm:$0xff]
        %v700 = vld [vmem:[#allocation2 + $0x60] sm:$0xff]
        %v701 = vld [vmem:[#allocation2 + $0x68] sm:$0xff]
        %v702 = vld [vmem:[#allocation2 + $0x70] sm:$0xff]
        %v703 = vld [vmem:[#allocation2 + $0x78] sm:$0xff]
        %v704 = vld [vmem:[#allocation2 + $0x80] sm:$0xff]
        %v705 = vld [vmem:[#allocation2 + $0x88] sm:$0xff]
        %v706 = vld [vmem:[#allocation2 + $0x90] sm:$0xff]
        %v707 = vld [vmem:[#allocation2 + $0x98] sm:$0xff]
        %v708 = vld [vmem:[#allocation2 + $0xa0] sm:$0xff]
        %v709 = vld [vmem:[#allocation2 + $0xa8] sm:$0xff]
        %v710 = vld [vmem:[#allocation2 + $0xb0] sm:$0xff]
        %v711 = vld [vmem:[#allocation2 + $0xb8] sm:$0xff]
        %v712 = vld [vmem:[#allocation2 + $0xc0] sm:$0xff]
        %v713 = vld [vmem:[#allocation2 + $0xc8] sm:$0xff]
        %v714 = vld [vmem:[#allocation2 + $0xd0] sm:$0xff]
        %v715 = vld [vmem:[#allocation2 + $0xd8] sm:$0xff]
        %v716 = vld [vmem:[#allocation2 + $0xe0] sm:$0xff]
        %v717 = vld [vmem:[#allocation2 + $0xe8] sm:$0xff]
        %v718 = vld [vmem:[#allocation2 + $0xf0] sm:$0xff]
        %v719 = vld [vmem:[#allocation2 + $0xf8] sm:$0xff]
        %v720 = vld [vmem:[%s287] sm:$0x1]
        %v722 = vperm.slane %v720, 0
        %v724 = vmul.f32 %v688, %v722
        %v725 = vmul.f32 %v689, %v722
        %v726 = vmul.f32 %v690, %v722
        %v727 = vmul.f32 %v691, %v722
        %v728 = vmul.f32 %v692, %v722
        %v729 = vmul.f32 %v693, %v722
        %v730 = vmul.f32 %v694, %v722
        %v731 = vmul.f32 %v695, %v722
        %v732 = vmul.f32 %v696, %v722
        %v733 = vmul.f32 %v697, %v722
        %v734 = vmul.f32 %v698, %v722
        %v735 = vmul.f32 %v699, %v722
        %v736 = vmul.f32 %v700, %v722
        %v737 = vmul.f32 %v701, %v722
        %v738 = vmul.f32 %v702, %v722
        %v739 = vmul.f32 %v703, %v722
        %v740 = vmul.f32 %v704, %v722
        %v741 = vmul.f32 %v705, %v722
        %v742 = vmul.f32 %v706, %v722
        %v743 = vmul.f32 %v707, %v722
        %v744 = vmul.f32 %v708, %v722
        %v745 = vmul.f32 %v709, %v722
        %v746 = vmul.f32 %v710, %v722
        %v747 = vmul.f32 %v711, %v722
        %v748 = vmul.f32 %v712, %v722
        %v749 = vmul.f32 %v713, %v722
        %v750 = vmul.f32 %v714, %v722
        %v751 = vmul.f32 %v715, %v722
        %v752 = vmul.f32 %v716, %v722
        %v753 = vmul.f32 %v717, %v722
        %v754 = vmul.f32 %v718, %v722
        %v755 = vmul.f32 %v719, %v722
        %v756 = vld [vmem:[%s290] sm:$0x1]
        %v758 = vperm.slane %v756, 0
        %v760 = vadd.f32 %v724, %v758
        %v761 = vadd.f32 %v725, %v758
        %v762 = vadd.f32 %v726, %v758
        %v763 = vadd.f32 %v727, %v758
        %v764 = vadd.f32 %v728, %v758
        %v765 = vadd.f32 %v729, %v758
        %v766 = vadd.f32 %v730, %v758
        %v767 = vadd.f32 %v731, %v758
        %v768 = vadd.f32 %v732, %v758
        %v769 = vadd.f32 %v733, %v758
        %v770 = vadd.f32 %v734, %v758
        %v771 = vadd.f32 %v735, %v758
        %v772 = vadd.f32 %v736, %v758
        %v773 = vadd.f32 %v737, %v758
        %v774 = vadd.f32 %v738, %v758
        %v775 = vadd.f32 %v739, %v758
        %v776 = vadd.f32 %v740, %v758
        %v777 = vadd.f32 %v741, %v758
        %v778 = vadd.f32 %v742, %v758
        %v779 = vadd.f32 %v743, %v758
        %v780 = vadd.f32 %v744, %v758
        %v781 = vadd.f32 %v745, %v758
        %v782 = vadd.f32 %v746, %v758
        %v783 = vadd.f32 %v747, %v758
        %v784 = vadd.f32 %v748, %v758
        %v785 = vadd.f32 %v749, %v758
        %v786 = vadd.f32 %v750, %v758
        %v787 = vadd.f32 %v751, %v758
        %v788 = vadd.f32 %v752, %v758
        %v789 = vadd.f32 %v753, %v758
        %v790 = vadd.f32 %v754, %v758
        %v791 = vadd.f32 %v755, %v758
        %v792 = vmax.f32 %v760, 0.0
        %v793 = vmax.f32 %v761, 0.0
        %v794 = vmax.f32 %v762, 0.0
        %v795 = vmax.f32 %v763, 0.0
        %v796 = vmax.f32 %v764, 0.0
        %v797 = vmax.f32 %v765, 0.0
        %v798 = vmax.f32 %v766, 0.0
        %v799 = vmax.f32 %v767, 0.0
        %v800 = vmax.f32 %v768, 0.0
        %v801 = vmax.f32 %v769, 0.0
        %v802 = vmax.f32 %v770, 0.0
        %v803 = vmax.f32 %v771, 0.0
        %v804 = vmax.f32 %v772, 0.0
        %v805 = vmax.f32 %v773, 0.0
        %v806 = vmax.f32 %v774, 0.0
        %v807 = vmax.f32 %v775, 0.0
        %v808 = vmax.f32 %v776, 0.0
        %v809 = vmax.f32 %v777, 0.0
        %v810 = vmax.f32 %v778, 0.0
        %v811 = vmax.f32 %v779, 0.0
        %v812 = vmax.f32 %v780, 0.0
        %v813 = vmax.f32 %v781, 0.0
        %v814 = vmax.f32 %v782, 0.0
        %v815 = vmax.f32 %v783, 0.0
        %v816 = vmax.f32 %v784, 0.0
        %v817 = vmax.f32 %v785, 0.0
        %v818 = vmax.f32 %v786, 0.0
        %v819 = vmax.f32 %v787, 0.0
        %v820 = vmax.f32 %v788, 0.0
        %v821 = vmax.f32 %v789, 0.0
        %v822 = vmax.f32 %v790, 0.0
        %v823 = vmax.f32 %v791, 0.0
        %824 = vst.msk [vmem:[%s298] sm:$0xff] %vm652, %v792
        %825 = vst.msk [vmem:[%s298 + $0x8] sm:$0xff] %vm652, %v793
        %826 = vst.msk [vmem:[%s298 + $0x10] sm:$0xff] %vm652, %v794
        %827 = vst.msk [vmem:[%s298 + $0x18] sm:$0xff] %vm652, %v795
        %828 = vst.msk [vmem:[%s298 + $0x20] sm:$0xff] %vm652, %v796
        %829 = vst.msk [vmem:[%s298 + $0x28] sm:$0xff] %vm652, %v797
        %830 = vst.msk [vmem:[%s298 + $0x30] sm:$0xff] %vm652, %v798
        %831 = vst.msk [vmem:[%s298 + $0x38] sm:$0xff] %vm652, %v799
        %832 = vst.msk [vmem:[%s298 + $0x40] sm:$0xff] %vm652, %v800
        %833 = vst.msk [vmem:[%s298 + $0x48] sm:$0xff] %vm652, %v801
        %834 = vst.msk [vmem:[%s298 + $0x50] sm:$0xff] %vm652, %v802
        %835 = vst.msk [vmem:[%s298 + $0x58] sm:$0xff] %vm652, %v803
        %836 = vst.msk [vmem:[%s298 + $0x60] sm:$0xff] %vm652, %v804
        %837 = vst.msk [vmem:[%s298 + $0x68] sm:$0xff] %vm652, %v805
        %838 = vst.msk [vmem:[%s298 + $0x70] sm:$0xff] %vm652, %v806
        %839 = vst.msk [vmem:[%s298 + $0x78] sm:$0xff] %vm652, %v807
        %840 = vst.msk [vmem:[%s298 + $0x80] sm:$0xff] %vm652, %v808
        %841 = vst.msk [vmem:[%s298 + $0x88] sm:$0xff] %vm652, %v809
        %842 = vst.msk [vmem:[%s298 + $0x90] sm:$0xff] %vm652, %v810
        %843 = vst.msk [vmem:[%s298 + $0x98] sm:$0xff] %vm652, %v811
        %844 = vst.msk [vmem:[%s298 + $0xa0] sm:$0xff] %vm652, %v812
        %845 = vst.msk [vmem:[%s298 + $0xa8] sm:$0xff] %vm652, %v813
        %846 = vst.msk [vmem:[%s298 + $0xb0] sm:$0xff] %vm652, %v814
        %847 = vst.msk [vmem:[%s298 + $0xb8] sm:$0xff] %vm652, %v815
        %848 = vst.msk [vmem:[%s298 + $0xc0] sm:$0xff] %vm652, %v816
        %849 = vst.msk [vmem:[%s298 + $0xc8] sm:$0xff] %vm652, %v817
        %850 = vst.msk [vmem:[%s298 + $0xd0] sm:$0xff] %vm652, %v818
        %851 = vst.msk [vmem:[%s298 + $0xd8] sm:$0xff] %vm652, %v819
        %852 = vst.msk [vmem:[%s298 + $0xe0] sm:$0xff] %vm652, %v820
        %853 = vst.msk [vmem:[%s298 + $0xe8] sm:$0xff] %vm652, %v821
        %854 = vst.msk [vmem:[%s298 + $0xf0] sm:$0xff] %vm652, %v822
        %855 = vst.msk [vmem:[%s298 + $0xf8] sm:$0xff] %vm652, %v823
      $region44: #{tpu_custom_call.1} parent=35 // pred_fallthru
        _
      %s856 = smul.u32 32, %s20
      %p857 = scmp.lt.s32.totalorder %s856, 63
      %s858 = scalar_select %p857, %s856, 63
      %p859 = scmp.lt.s32.totalorder %s21, 0
      %s860 = scalar_select %p859, %s21, 0
      %s861 = sadd.s32 %s860, %s858
      %s862 = smul.addr %s861, 8
      %s863 = scalar_lea.vmem %s4, %s862
      // Predicated region
      $region45: #{tpu_custom_call.1} parent=35 // pred_check
        %p864 = pneg %p162
      $region46: #{tpu_custom_call.1} parent=35 // pred_check_branch
        %866 = sbr.rel (%p864) target = $region48
      $region47: #{tpu_custom_call.1} parent=35 // pred_region
        %s867 = smul.u32 32, %s20
      $region48: #{tpu_custom_call.1} parent=35 // pred_fallthru
        _
    $region36: #{tpu_custom_call.1} parent=5 // pred_fallthru
      _
    %p868 = scmp.le.s32.totalorder 2, %s10
    // Predicated region
    $region49: #{tpu_custom_call.1} parent=5 // pred_check
      %p869 = pneg %p868
    $region50: #{tpu_custom_call.1} parent=5 // pred_check_branch
      %871 = sbr.rel (%p869) target = $region52
    $region51: #{tpu_custom_call.1} parent=5 // pred_region
      %s872 = ssub.s32 %s10, 2
      // Predicated region
      $region53: #{tpu_custom_call.1} parent=51 // pred_check
        %p873 = pneg %p168
      $region54: #{tpu_custom_call.1} parent=51 // pred_check_branch
        %875 = sbr.rel (%p873) target = $region56
      $region55: #{tpu_custom_call.1} parent=51 // pred_region
        %s876 = smul.u32 32, %s23
        %p877 = scmp.lt.s32.totalorder %s876, 63
        %s878 = scalar_select %p877, %s876, 63
        %p879 = scmp.lt.s32.totalorder %s24, 0
        %s880 = scalar_select %p879, %s24, 0
        %s881 = sadd.s32 %s880, %s878
        %s882 = smul.addr %s881, 8
        %s883 = scalar_lea.vmem %s4, %s882
      $region56: #{tpu_custom_call.1} parent=51 // pred_fallthru
        _
    $region52: #{tpu_custom_call.1} parent=5 // pred_fallthru
      _
  $region6: #{tpu_custom_call.1} parent=0 // loop_footer
    %s14 = sadd.s32 1, %s10
  $region7: #{tpu_custom_call.1} parent=0 // loop_footer_branch
    %9 = sbr.rel target = $region3
  $region8: #{tpu_custom_call.1} parent=0 // loop_exit
    _

</llo_original>
